<compile_context>
chip_gen: v5e
topology: v5e:2x2
jax: 0.10.0
libtpu: 0.0.40
codegen_flags: <defaults>
</compile_context>

<pallas_src>
import jax
import jax.numpy as jnp
from jax.experimental import pallas as pl
from jax.experimental.pallas import tpu as pltpu

_LANE = 128                    # vreg fast axis (lanes)
_SUB = 8                       # sublane granularity
_TARGET_BLOCK_BYTES = 4 << 20  # per-array block-size target (4 MiB)
_MAX_BUFFER_BYTES = 48 << 20   # cap on total double-buffered streaming buffers
_MIN_SPLIT_ROWS = 1024         # below this, one block (too small to split)


def _sigmoid_threshold_kernel(slope_ref, x_ref, t_ref, o_ref):
    # out = sigmoid(slope * (x - thresh)).  Compute in f32 (safe on v5e which
    # has no bf16 VPU/EUP); single transcendental via tanh keeps the EUP slot
    # off the critical path even at v7x HBM bandwidth.
    s = slope_ref[0]
    z = s * (x_ref[...].astype(jnp.float32) - t_ref[...].astype(jnp.float32))
    o_ref[...] = (0.5 * jnp.tanh(0.5 * z) + 0.5).astype(o_ref.dtype)


def _hard_threshold_kernel(x_ref, t_ref, o_ref):
    # out = (x > thresh) as int8 {0,1}; cast to bool in the wrapper.
    # TODO(synk): emit jnp.bool_ directly once bool-dtype VMEM outputs are
    # reliably supported by Mosaic; that removes the 1B/elem wrapper-cast pass.
    o_ref[...] = (x_ref[...] > t_ref[...]).astype(o_ref.dtype)


def _vmem_capacity_bytes():
    try:
        return int(pltpu.get_tpu_info().vmem_capacity_bytes)
    except Exception:
        return 64 << 20  # conservative fallback: v7x per-TensorCore VMEM


def _plan_blocks(rows, x_itemsize, t_itemsize, o_itemsize):
    """Pick block_rows for the (rows, 128) slab. Returns (block_rows, vmem_limit)."""
    row_bytes = _LANE * (x_itemsize + t_itemsize + o_itemsize)
    vmem_cap = _vmem_capacity_bytes()
    buf_budget = min(_MAX_BUFFER_BYTES, (vmem_cap * 3) // 5)

    cap_rows = _TARGET_BLOCK_BYTES // (_LANE * max(x_itemsize, t_itemsize, o_itemsize))
    cap_rows = min(cap_rows, buf_budget // (2 * row_bytes))   # 2x: double buffering
    cap_rows = max(_SUB, (cap_rows // _SUB) * _SUB)

    if rows <= cap_rows and rows < _MIN_SPLIT_ROWS:
        block_rows = rows                # single block == full array dims
    else:
        # >= 2 blocks so the "parallel" axis can shard across v7x's two cores;
        # block rows are multiples of 8, ragged last block is masked by Pallas.
        nblocks = max(2, pl.cdiv(rows, cap_rows))
        block_rows = min(cap_rows, pl.cdiv(pl.cdiv(rows, nblocks), _SUB) * _SUB)

    buffer_bytes = 2 * block_rows * row_bytes
    vmem_limit = int(min((vmem_cap * 3) // 4, buffer_bytes + (16 << 20)))
    return block_rows, vmem_limit


def _to_lane_slab(a, rows):
    """Reshape flat contents to (rows, 128); pads only when n % 128 != 0."""
    flat = a.reshape(-1)
    pad = rows * _LANE - flat.shape[0]
    if pad:   # static Python branch; no extra HBM pass in the common case
        flat = jnp.pad(flat, (0, pad))
    return flat.reshape(rows, _LANE)


def threshold_random_mask(inputs, thresh, slope=None):
    """Pallas implementation of ThresholdRandomMask.forward."""
    assert inputs.shape == thresh.shape, "inputs and thresh must have same shape"
    orig_shape = inputs.shape
    n = inputs.size

    out_dtype = inputs.dtype if slope is not None else jnp.int8

    rows = pl.cdiv(n, _LANE)
    block_rows, vmem_limit = _plan_blocks(
        rows,
        jnp.dtype(inputs.dtype).itemsize,
        jnp.dtype(thresh.dtype).itemsize,
        jnp.dtype(out_dtype).itemsize,
    )
    grid = (pl.cdiv(rows, block_rows),)

    x2 = _to_lane_slab(inputs, rows)       # native dtype, no wrapper upcast
    t2 = _to_lane_slab(thresh, rows)

    tile_spec = pl.BlockSpec((block_rows, _LANE), lambda i: (i, 0))
    out_spec = pl.BlockSpec((block_rows, _LANE), lambda i: (i, 0))
    cparams = pltpu.CompilerParams(
        dimension_semantics=("parallel",),
        vmem_limit_bytes=vmem_limit,
    )

    if slope is not None:
        slope_arr = jnp.asarray(slope, dtype=jnp.float32).reshape((1,))
        smem_spec = pl.BlockSpec((1,), lambda i: (0,),
                                 memory_space=pltpu.MemorySpace.SMEM)
        out2 = pl.pallas_call(
            _sigmoid_threshold_kernel,
            out_shape=jax.ShapeDtypeStruct((rows, _LANE), out_dtype),
            grid=grid,
            in_specs=[smem_spec, tile_spec, tile_spec],
            out_specs=out_spec,
            compiler_params=cparams,
        )(slope_arr, x2, t2)
    else:
        out2 = pl.pallas_call(
            _hard_threshold_kernel,
            out_shape=jax.ShapeDtypeStruct((rows, _LANE), out_dtype),
            grid=grid,
            in_specs=[tile_spec, tile_spec],
            out_specs=out_spec,
            compiler_params=cparams,
        )(x2, t2)

    if rows * _LANE == n:                  # common case: no pad, no slice pass
        out = out2.reshape(orig_shape)
    else:
        out = out2.reshape(-1)[:n].reshape(orig_shape)

    if slope is None:
        out = out.astype(jnp.bool_)
    return out


class ThresholdRandomMask:
    """Thin module-like wrapper mirroring the PyTorch class."""

    def __init__(self, slope):
        self.slope = slope if slope is not None else None

    def __call__(self, inputs, thresh):
        return threshold_random_mask(inputs, thresh, slope=self.slope)


def _ref_forward(inputs, thresh, slope):
    if slope is not None:
        return jax.nn.sigmoid(slope * (inputs - thresh))
    return inputs > thresh


if __name__ == "__main__":
    key = jax.random.PRNGKey(0)
    k1, k2, k3, k4 = jax.random.split(key, 4)

    B, C, H, W = 2, 4, 16, 16  # NCHW, matching the LOUPE usage
    inputs = jax.random.uniform(k1, (B, C, H, W), dtype=jnp.float32)
    thresh = jax.random.uniform(k2, (B, C, H, W), dtype=jnp.float32)

    # Sigmoid (slope given) branch.
    slope = 5.0
    mod = ThresholdRandomMask(slope)
    out = mod(inputs, thresh)
    jax.block_until_ready(out)
    ref = _ref_forward(inputs, thresh, slope)
    assert out.shape == (B, C, H, W) and out.dtype == jnp.float32
    assert jnp.allclose(out, ref, atol=1e-5, rtol=1e-5)

    # Hard-threshold (slope=None) branch.
    mod_bool = ThresholdRandomMask(None)
    out_bool = mod_bool(inputs, thresh)
    jax.block_until_ready(out_bool)
    assert out_bool.dtype == jnp.bool_
    assert bool(jnp.all(out_bool == _ref_forward(inputs, thresh, None)))

    # Dtype preservation: bf16 inputs stay bf16 (compute in f32 inside kernel).
    out_bf16 = mod(inputs.astype(jnp.bfloat16), thresh.astype(jnp.bfloat16))
    jax.block_until_ready(out_bf16)
    assert out_bf16.dtype == jnp.bfloat16
    assert jnp.allclose(out_bf16.astype(jnp.float32), ref, atol=5e-2)

    # Traced slope under jit: the SMEM-scalar slope means no recompile per
    # slope value and no ConcretizationTypeError for annealed slopes.
    jitted = jax.jit(lambda x, t, s: threshold_random_mask(x, t, slope=s))
    out_j = jitted(inputs, thresh, jnp.float32(3.0))
    jax.block_until_ready(out_j)
    assert jnp.allclose(out_j, _ref_forward(inputs, thresh, 3.0), atol=1e-5, rtol=1e-5)

    # Larger non-128-multiple shape: exercises the multi-block grid (>=2 blocks
    # for v7x megacore), the ragged last block, and the pad/slice fallback.
    xb = jax.random.uniform(k3, (2, 3, 149, 151), dtype=jnp.float32)
    tb = jax.random.uniform(k4, (2, 3, 149, 151), dtype=jnp.float32)
    out_b = mod(xb, tb)
    jax.block_until_ready(out_b)
    assert jnp.allclose(out_b, _ref_forward(xb, tb, slope), atol=1e-5, rtol=1e-5)
    out_b_bool = mod_bool(xb, tb)
    jax.block_until_ready(out_b_bool)
    assert bool(jnp.all(out_b_bool == _ref_forward(xb, tb, None)))

    print("KERNEL_OK")
</pallas_src>

<mosaic_0001>
module attributes {stable_mosaic.version = 11 : i64} {
  func.func @_sigmoid_threshold_kernel(%arg0: i32, %arg1: memref<1xf32, #tpu.memory_space<smem>>, %arg2: memref<16x128xf32, #tpu.memory_space<vmem>>, %arg3: memref<16x128xf32, #tpu.memory_space<vmem>>, %arg4: memref<16x128xf32, #tpu.memory_space<vmem>>) attributes {dimension_semantics = [#tpu.dimension_semantics<parallel>], iteration_bounds = array<i64: 1>, scalar_prefetch = 0 : i64, scratch_operands = 0 : i64, tpu.core_type = #tpu.core_type<tc>, window_params = [{transform_indices = @transform_0, window_bounds = array<i64: 1>}, {transform_indices = @transform_1, window_bounds = array<i64: 16, 128>}, {transform_indices = @transform_2, window_bounds = array<i64: 16, 128>}, {transform_indices = @transform_3, window_bounds = array<i64: 16, 128>}]} {
    %c0 = arith.constant 0 : index
    %0 = memref.load %arg1[%c0] : memref<1xf32, #tpu.memory_space<smem>>
    %c0_0 = arith.constant 0 : index
    %c0_1 = arith.constant 0 : index
    %1 = vector.load %arg2[%c0_0, %c0_1] : memref<16x128xf32, #tpu.memory_space<vmem>>, vector<16x128xf32>
    %c0_2 = arith.constant 0 : index
    %c0_3 = arith.constant 0 : index
    %2 = vector.load %arg3[%c0_2, %c0_3] : memref<16x128xf32, #tpu.memory_space<vmem>>, vector<16x128xf32>
    %3 = arith.subf %1, %2 : vector<16x128xf32>
    %4 = vector.broadcast %0 : f32 to vector<16x128xf32>
    %5 = arith.mulf %4, %3 : vector<16x128xf32>
    %cst = arith.constant 5.000000e-01 : f32
    %6 = vector.broadcast %cst : f32 to vector<16x128xf32>
    %7 = arith.mulf %6, %5 : vector<16x128xf32>
    %8 = math.tanh %7 : vector<16x128xf32>
    %cst_4 = arith.constant 5.000000e-01 : f32
    %9 = vector.broadcast %cst_4 : f32 to vector<16x128xf32>
    %10 = arith.mulf %9, %8 : vector<16x128xf32>
    %cst_5 = arith.constant 5.000000e-01 : f32
    %11 = vector.broadcast %cst_5 : f32 to vector<16x128xf32>
    %12 = arith.addf %10, %11 : vector<16x128xf32>
    %c0_6 = arith.constant 0 : index
    %c0_7 = arith.constant 0 : index
    %13 = vector.load %arg4[%c0_6, %c0_7] : memref<16x128xf32, #tpu.memory_space<vmem>>, vector<16x128xf32>
    tpu.vector_store %arg4[%c0_6, %c0_7], %12 {strides = array<i32>} : memref<16x128xf32, #tpu.memory_space<vmem>>, vector<16x128xf32>,
    return
  }
  func.func @transform_0(%arg0: i32) -> i32 {
    %c0_i32 = arith.constant 0 : i32
    %c0_i32_0 = arith.constant 0 : i32
    return %c0_i32 : i32
  }
  func.func @transform_1(%arg0: i32) -> (i32, i32) {
    %c0_i32 = arith.constant 0 : i32
    %c0_i32_0 = arith.constant 0 : i32
    return %arg0, %c0_i32 : i32, i32
  }
  func.func @transform_2(%arg0: i32) -> (i32, i32) {
    %c0_i32 = arith.constant 0 : i32
    %c0_i32_0 = arith.constant 0 : i32
    return %arg0, %c0_i32 : i32, i32
  }
  func.func @transform_3(%arg0: i32) -> (i32, i32) {
    %c0_i32 = arith.constant 0 : i32
    %c0_i32_0 = arith.constant 0 : i32
    return %arg0, %c0_i32 : i32, i32
  }
}

</mosaic_0001>

<llo_original>
// kernel: tpu_custom_call.1
$region0: #{tpu_custom_call.1}
  #allocation0 [shape = 'u32[]', space=smem, size = 0x4, offset = 0x4, fixed_abs, tag = 'smem constant byte address 0x4 - core index']
  #allocation1 [shape = 'u32[72,128]{1,0:T(1,128)}', space=vmem, size = 0x9000, scoped, tag = 'internal scratch']
  #allocation2 [shape = 'f32[1]{0:T(128)S(6)}', space=smem, size = 0x200, scoped, tag = 'scoped memory for tpu_custom_call.1']
  %s0 = inlined_call_operand.<no memory space> [shape: f32[1], index: 0, kind: input, shape index: {}]
  %s1 = inlined_call_operand.hbm [shape: f32[16,128], index: 1, kind: input, shape index: {}]
  %s2 = inlined_call_operand.hbm [shape: f32[16,128], index: 2, kind: input, shape index: {}]
  %s3 = inlined_call_operand.hbm [shape: f32[16,128], index: 3, kind: output, shape index: {}]
  %s4 = sld [smem:[#allocation0]]
  $region30: #{tpu_custom_call.1} parent=0
    _
  %s6 = ssub.s32 1, %s4
  %s7 = scalar_select 0, %s6, %s4
  %8 = sst [smem:[#allocation2]] %s0
  $region1: #{tpu_custom_call.1} parent=0
    #allocation3 [shape = 'u8[8192]{0}', space=vmem, size = 0x2000, scoped, tag = 'input window, operand 1, single buffered']
    #allocation4 [shape = 's32[1]{0}', space=sflag, size = 0x4, scoped, tag = 'scoped memory for tpu_custom_call.1']
    #allocation5 [shape = 's32[1]{0}', space=sflag, size = 0x4, scoped, tag = 'scoped memory for tpu_custom_call.1']
    #allocation6 [shape = 'u8[8192]{0}', space=vmem, size = 0x2000, scoped, tag = 'input window, operand 2, single buffered']
    #allocation7 [shape = 's32[1]{0}', space=sflag, size = 0x4, scoped, tag = 'scoped memory for tpu_custom_call.1']
    #allocation8 [shape = 'u8[8192]{0}', space=vmem, size = 0x2000, scoped, tag = 'output window, operand 0, single buffered']
    %9 = vsyncpa [#allocation4], 0
    %10 = vsyncpa [#allocation7], 0
    %11 = vsyncpa [#allocation5], 0
    // Predicated region
    $region2: #{tpu_custom_call.1} parent=1 // pred_check
      _
    $region3: #{tpu_custom_call.1} parent=1 // pred_check_branch
      %13 = sbr.rel (0) target = $region5
    $region4: #{tpu_custom_call.1} parent=1 // pred_region
      _
    $region5: #{tpu_custom_call.1} parent=1 // pred_fallthru
      _
    // Predicated region
    $region6: #{tpu_custom_call.1} parent=1 // pred_check
      _
    $region7: #{tpu_custom_call.1} parent=1 // pred_check_branch
      %15 = sbr.rel (0) target = $region9
    $region8: #{tpu_custom_call.1} parent=1 // pred_region
      %17 = vsyncadd [#allocation4], 0
      %s18 = sshll.u32 %s1, 4
      %s19 = int_to_ptr.hbm [resolvable:$true] %s18
      %s20 = sshll.u32 [#allocation3], 4
      %s21 = int_to_ptr.vmem [resolvable:$true] %s20
      %26 = dma.hbm_to_vmem [thread:$0]  %s19, 256, %s21, [#allocation4], 128, 128, 8
    $region9: #{tpu_custom_call.1} parent=1 // pred_fallthru
      _
    // Predicated region
    $region10: #{tpu_custom_call.1} parent=1 // pred_check
      _
    $region11: #{tpu_custom_call.1} parent=1 // pred_check_branch
      %28 = sbr.rel (0) target = $region13
    $region12: #{tpu_custom_call.1} parent=1 // pred_region
      %30 = vsyncadd [#allocation7], 0
      %s31 = sshll.u32 %s2, 4
      %s32 = int_to_ptr.hbm [resolvable:$true] %s31
      %s33 = sshll.u32 [#allocation6], 4
      %s34 = int_to_ptr.vmem [resolvable:$true] %s33
      %39 = dma.hbm_to_vmem [thread:$0]  %s32, 256, %s34, [#allocation7], 128, 128, 8
    $region13: #{tpu_custom_call.1} parent=1 // pred_fallthru
      _
    // Predicated region
    $region14: #{tpu_custom_call.1} parent=1 // pred_check
      _
    $region15: #{tpu_custom_call.1} parent=1 // pred_check_branch
      %41 = sbr.rel (0) target = $region17
    $region16: #{tpu_custom_call.1} parent=1 // pred_region
      %43 = dma.done [#allocation4], 256
    $region17: #{tpu_custom_call.1} parent=1 // pred_fallthru
      _
    // Predicated region
    $region18: #{tpu_custom_call.1} parent=1 // pred_check
      _
    $region19: #{tpu_custom_call.1} parent=1 // pred_check_branch
      %45 = sbr.rel (0) target = $region21
    $region20: #{tpu_custom_call.1} parent=1 // pred_region
      %47 = dma.done [#allocation7], 256
    $region21: #{tpu_custom_call.1} parent=1 // pred_fallthru
      _
    %s48 = sld [smem:[#allocation2]]
    %v49 = vld [vmem:[#allocation3] sm:$0xff]
    %v50 = vld [vmem:[#allocation3 + $0x8] sm:$0xff]
    %v51 = vld [vmem:[#allocation6] sm:$0xff]
    %v52 = vld [vmem:[#allocation6 + $0x8] sm:$0xff]
    %v53 = vsub.f32 %v49, %v51
    %v54 = vsub.f32 %v50, %v52
    %v55 = vstv %s48
    %v56 = vmul.f32 %v55, %v53
    %v57 = vmul.f32 %v55, %v54
    %v58 = vmul.f32 %v56, 0.5
    %v59 = vmul.f32 %v57, 0.5
    %v60 = vtanh.pop %v58
    %v61 = vtanh.pop %v59
    %v62 = vmul.f32 %v60, 0.5
    %v63 = vmul.f32 %v61, 0.5
    %v64 = vadd.f32 %v62, 0.5
    %v65 = vadd.f32 %v63, 0.5
    %66 = vst [vmem:[#allocation8] sm:$0xff] %v64
    %67 = vst [vmem:[#allocation8 + $0x8] sm:$0xff] %v65
    // Predicated region
    $region22: #{tpu_custom_call.1} parent=1 // pred_check
      _
    $region23: #{tpu_custom_call.1} parent=1 // pred_check_branch
      %69 = sbr.rel (0) target = $region25
    $region24: #{tpu_custom_call.1} parent=1 // pred_region
      %71 = vsyncadd [#allocation5], 0
      %s72 = sshll.u32 [#allocation8], 4
      %s73 = int_to_ptr.vmem [resolvable:$true] %s72
      %s74 = sshll.u32 %s3, 4
      %s75 = int_to_ptr.hbm [resolvable:$true] %s74
      %80 = dma.vmem_to_hbm [thread:$0]  %s73, 256, %s75, [#allocation5], 128, 128, 8
    $region25: #{tpu_custom_call.1} parent=1 // pred_fallthru
      _
    // Predicated region
    $region26: #{tpu_custom_call.1} parent=1 // pred_check
      _
    $region27: #{tpu_custom_call.1} parent=1 // pred_check_branch
      %82 = sbr.rel (0) target = $region29
    $region28: #{tpu_custom_call.1} parent=1 // pred_region
      %84 = dma.done [#allocation5], 256
    $region29: #{tpu_custom_call.1} parent=1 // pred_fallthru
      _
    %85 = vsyncpa [#allocation4], 1
    %86 = vsyncpa [#allocation7], 1
    %87 = vsyncpa [#allocation5], 1

</llo_original>
